<compile_context>
chip_gen: v5e
topology: v5e:2x2
jax: 0.10.0
libtpu: 0.0.40
codegen_flags: <defaults>
</compile_context>

<pallas_src>
import functools

import jax
import jax.numpy as jnp
from jax.experimental import pallas as pl
from jax.experimental.pallas import tpu as pltpu


_LANES = 128
_ROW_CAP = 512            # max rows (N*C) per block
_MAX_LANE_GROUPS = 256    # cap on the static unroll of the lane-group loop


def _gap_kernel(x_ref, o_ref, acc_ref, *, inv_hw, lane_groups):
    """Global average pool over the last (H*W) axis, chunked over grid axis 1.

    x_ref:   (1, row_block, hw_chunk)      input block (hw_chunk % 128 == 0)
    o_ref:   (1, row_block)                output block
    acc_ref: (1, row_block, 128) float32   running lane-group sums (persists over k)
    """
    k = pl.program_id(1)

    @pl.when(k == 0)
    def _init():
        acc_ref[...] = jnp.zeros_like(acc_ref)

    # Pure-VPU accumulation: one elementwise add per lane-aligned 128-wide
    # slice.  No per-chunk XLU reduce, no relayout -> free filler under DMA.
    acc = acc_ref[...]
    for g in range(lane_groups):
        acc = acc + x_ref[:, :, g * _LANES:(g + 1) * _LANES].astype(jnp.float32)
    acc_ref[...] = acc

    @pl.when(k == pl.num_programs(1) - 1)
    def _finalize():
        # Single cross-lane (XLU) reduce per row block, once at the very end.
        total = jnp.sum(acc_ref[...], axis=-1)
        o_ref[...] = (total * inv_hw).astype(o_ref.dtype)


def _round_up(x, m):
    return ((x + m - 1) // m) * m


def _cdiv(a, b):
    return -(-a // b)


def _largest_divisor_multiple(dim, quantum, cap):
    """Largest multiple of `quantum` that divides `dim` and is <= cap.

    Assumes `quantum` divides `dim` and `quantum <= cap`.
    """
    d = (min(cap, dim) // quantum) * quantum
    while d > quantum:
        if dim % d == 0:
            return d
        d -= quantum
    return quantum


def _input_block_byte_budget():
    """Generation-aware cap on one (double-buffered) input block."""
    try:
        vmem_cap = getattr(pltpu.get_tpu_info(), "vmem_capacity_bytes", None)
    except Exception:
        vmem_cap = None
    if vmem_cap is not None and vmem_cap >= (100 << 20):
        # v5e / v6e: 128 MiB physical VMEM -> 16 MiB blocks amortize the
        # ~0.35us per-grid-step overhead and approach the HBM roofline.
        return 16 << 20
    # v7x (64 MiB per TensorCore) or unknown: right-size so 2x double-buffered
    # input + accumulator stays well under the physical ceiling.
    return 8 << 20


def flatten_forward(x):
    """Equivalent of Flatten.forward: (N, C, H, W) -> (N, C)."""
    n, c, h, w = x.shape
    rows = n * c
    hw = h * w

    # Fast path: lane-sparse H*W (< 128, e.g. 7x7 CNN heads) is better served
    # by XLA's fused reduce than by masked, short strided Pallas DMAs.
    if hw < _LANES:
        return jnp.mean(x, axis=(2, 3))

    inv_hw = 1.0 / float(hw)
    itemsize = jnp.dtype(x.dtype).itemsize

    # --- Row blocking (rows = N*C) -------------------------------------------
    if rows % _LANES == 0 and rows >= 2 * _LANES:
        # >= 2 row blocks so the "parallel" axis feeds both v7x TensorCores;
        # row_block stays a multiple of 128 (lane-dense output stores).
        target_blocks = max(2, _cdiv(rows, _ROW_CAP))
        row_block = _largest_divisor_multiple(rows, _LANES, rows // target_blocks)
        rows_padded = rows
    elif rows <= _ROW_CAP:
        row_block = rows                       # full-extent block (always legal)
        rows_padded = rows
    else:
        # Awkward large row count: pad to a multiple of 128 and split evenly
        # (never request a full-extent block bigger than VMEM).
        rows_padded = _round_up(rows, _LANES)
        target_blocks = max(2, _cdiv(rows_padded, _ROW_CAP))
        row_block = _round_up(_cdiv(rows_padded, target_blocks), _LANES)
        rows_padded = target_blocks * row_block
    n_row_blocks = rows_padded // row_block

    # --- H*W chunking (reduction axis; chunks are multiples of 128 lanes) ----
    block_bytes = _input_block_byte_budget()
    hw_cap = max(_LANES, (block_bytes // (row_block * itemsize)) // _LANES * _LANES)
    hw_cap = min(hw_cap, _MAX_LANE_GROUPS * _LANES)

    hw_p128 = _round_up(hw, _LANES)
    if hw_p128 <= hw_cap:
        n_hw_chunks = 1
        hw_chunk = hw_p128
    else:
        n_hw_chunks = _cdiv(hw_p128, hw_cap)
        hw_chunk = _round_up(_cdiv(hw_p128, n_hw_chunks), _LANES)
    hw_padded = n_hw_chunks * hw_chunk
    lane_groups = hw_chunk // _LANES

    # --- Layout: (N, C, H, W) -> (1, rows_padded, hw_padded) -----------------
    x2d = x.reshape(rows, hw)
    if rows_padded != rows or hw_padded != hw:
        # Zero padding is sum-neutral; the 1/(H*W) scale uses the true H*W.
        x2d = jnp.pad(x2d, ((0, rows_padded - rows), (0, hw_padded - hw)))
    x3 = x2d.reshape(1, rows_padded, hw_padded)

    # --- Explicit VMEM budget (double-buffered in/out + accumulator) ---------
    in_bytes = row_block * hw_chunk * itemsize
    acc_bytes = row_block * _LANES * 4
    out_bytes = row_block * itemsize
    needed = 2 * in_bytes + acc_bytes + 2 * out_bytes + (2 << 20)
    vmem_limit = int(max(needed, 16 << 20))

    out = pl.pallas_call(
        functools.partial(_gap_kernel, inv_hw=inv_hw, lane_groups=lane_groups),
        out_shape=jax.ShapeDtypeStruct((1, rows_padded), x.dtype),
        grid_spec=pltpu.PrefetchScalarGridSpec(
            num_scalar_prefetch=0,
            grid=(n_row_blocks, n_hw_chunks),
            in_specs=[
                pl.BlockSpec((1, row_block, hw_chunk), lambda i, k: (0, i, k)),
            ],
            out_specs=pl.BlockSpec((1, row_block), lambda i, k: (0, i)),
            scratch_shapes=[pltpu.VMEM((1, row_block, _LANES), jnp.float32)],
        ),
        compiler_params=pltpu.CompilerParams(
            # Row-block axis parallel (megacore on v7x); H*W reduction arbitrary.
            dimension_semantics=("parallel", "arbitrary"),
            vmem_limit_bytes=vmem_limit,
        ),
    )(x3)

    return out[0, :rows].reshape(n, c)


if __name__ == "__main__":
    key = jax.random.PRNGKey(0)

    # 1) Small NCHW input consistent with the module's forward.
    x = jax.random.normal(key, (2, 4, 16, 16), dtype=jnp.float32)
    out = jax.block_until_ready(flatten_forward(x))
    ref = jnp.mean(x, axis=(2, 3))
    assert out.shape == (2, 4), out.shape
    assert jnp.allclose(out, ref, atol=1e-5, rtol=1e-5), "mismatch (small)"

    # 2) Non-128-multiple dims -> zero-padding path (sum-neutral).
    x_pad = jax.random.normal(key, (3, 5, 14, 14), dtype=jnp.float32)
    out_pad = jax.block_until_ready(flatten_forward(x_pad))
    ref_pad = jnp.mean(x_pad, axis=(2, 3))
    assert out_pad.shape == (3, 5), out_pad.shape
    assert jnp.allclose(out_pad, ref_pad, atol=1e-5, rtol=1e-5), "mismatch (pad)"

    # 3) Tiny spatial (7x7 < 128 lanes) -> jnp.mean fast path.
    x_small = jax.random.normal(key, (2, 3, 7, 7), dtype=jnp.float32)
    out_small = jax.block_until_ready(flatten_forward(x_small))
    ref_small = jnp.mean(x_small, axis=(2, 3))
    assert out_small.shape == (2, 3), out_small.shape
    assert jnp.allclose(out_small, ref_small, atol=1e-5, rtol=1e-5), "mismatch (tiny hw)"

    # 4) Row splitting (N*C = 512 -> >=2 parallel row blocks).
    x_rows = jax.random.normal(key, (2, 256, 32, 32), dtype=jnp.float32)
    out_rows = jax.block_until_ready(flatten_forward(x_rows))
    ref_rows = jnp.mean(x_rows, axis=(2, 3))
    assert out_rows.shape == (2, 256), out_rows.shape
    assert jnp.allclose(out_rows, ref_rows, atol=1e-4, rtol=1e-4), "mismatch (row split)"

    # 5) Large H*W -> multi-step reduction axis with accumulator init/finalize.
    x_hw = jax.random.normal(key, (1, 8, 256, 256), dtype=jnp.float32)
    out_hw = jax.block_until_ready(flatten_forward(x_hw))
    ref_hw = jnp.mean(x_hw, axis=(2, 3))
    assert out_hw.shape == (1, 8), out_hw.shape
    assert jnp.allclose(out_hw, ref_hw, atol=1e-4, rtol=1e-4), "mismatch (hw chunked)"

    print("KERNEL_OK")
</pallas_src>

<mosaic_0001>
module attributes {stable_mosaic.version = 11 : i64} {
  func.func @_gap_kernel(%arg0: i32, %arg1: i32, %arg2: memref<1x8x256xf32, #tpu.memory_space<vmem>>, %arg3: memref<1x8xf32, #tpu.memory_space<vmem>>, %arg4: memref<1x8x128xf32, #tpu.memory_space<vmem>>) attributes {dimension_semantics = [#tpu.dimension_semantics<parallel>, #tpu.dimension_semantics<arbitrary>], iteration_bounds = array<i64: 1, 1>, scalar_prefetch = 0 : i64, scratch_operands = 1 : i64, tpu.core_type = #tpu.core_type<tc>, window_params = [{transform_indices = @transform_0, window_bounds = array<i64: 1, 8, 256>}, {transform_indices = @transform_1, window_bounds = array<i64: 1, 8>}]} {
    %c0_i32 = arith.constant 0 : i32
    %0 = arith.cmpi eq, %arg1, %c0_i32 : i32
    %1 = arith.extui %0 : i1 to i32
    %c0_i32_0 = arith.constant 0 : i32
    %2 = arith.cmpi ne, %1, %c0_i32_0 : i32
    scf.if %2 {
      %cst = arith.constant 0.000000e+00 : f32
      %12 = vector.broadcast %cst : f32 to vector<1x8x128xf32>
      %c0_13 = arith.constant 0 : index
      %c0_14 = arith.constant 0 : index
      %c0_15 = arith.constant 0 : index
      %13 = vector.load %arg4[%c0_13, %c0_14, %c0_15] : memref<1x8x128xf32, #tpu.memory_space<vmem>>, vector<1x8x128xf32>
      tpu.vector_store %arg4[%c0_13, %c0_14, %c0_15], %12 {strides = array<i32>} : memref<1x8x128xf32, #tpu.memory_space<vmem>>, vector<1x8x128xf32>,
    } else {
    }
    %c0 = arith.constant 0 : index
    %c0_1 = arith.constant 0 : index
    %c0_2 = arith.constant 0 : index
    %3 = vector.load %arg4[%c0, %c0_1, %c0_2] : memref<1x8x128xf32, #tpu.memory_space<vmem>>, vector<1x8x128xf32>
    %c0_3 = arith.constant 0 : index
    %c0_4 = arith.constant 0 : index
    %c0_5 = arith.constant 0 : index
    %4 = vector.load %arg2[%c0_3, %c0_4, %c0_5] : memref<1x8x256xf32, #tpu.memory_space<vmem>>, vector<1x8x128xf32>
    %5 = arith.addf %3, %4 : vector<1x8x128xf32>
    %c0_6 = arith.constant 0 : index
    %c0_7 = arith.constant 0 : index
    %c128 = arith.constant 128 : index
    %6 = vector.load %arg2[%c0_6, %c0_7, %c128] : memref<1x8x256xf32, #tpu.memory_space<vmem>>, vector<1x8x128xf32>
    %7 = arith.addf %5, %6 : vector<1x8x128xf32>
    %c0_8 = arith.constant 0 : index
    %c0_9 = arith.constant 0 : index
    %c0_10 = arith.constant 0 : index
    %8 = vector.load %arg4[%c0_8, %c0_9, %c0_10] : memref<1x8x128xf32, #tpu.memory_space<vmem>>, vector<1x8x128xf32>
    tpu.vector_store %arg4[%c0_8, %c0_9, %c0_10], %7 {strides = array<i32>} : memref<1x8x128xf32, #tpu.memory_space<vmem>>, vector<1x8x128xf32>,
    %c0_i32_11 = arith.constant 0 : i32
    %9 = arith.cmpi eq, %arg1, %c0_i32_11 : i32
    %10 = arith.extui %9 : i1 to i32
    %c0_i32_12 = arith.constant 0 : i32
    %11 = arith.cmpi ne, %10, %c0_i32_12 : i32
    scf.if %11 {
      %c0_13 = arith.constant 0 : index
      %c0_14 = arith.constant 0 : index
      %c0_15 = arith.constant 0 : index
      %12 = vector.load %arg4[%c0_13, %c0_14, %c0_15] : memref<1x8x128xf32, #tpu.memory_space<vmem>>, vector<1x8x128xf32>
      %cst = arith.constant dense<0.000000e+00> : vector<1x8xf32>
      %13 = vector.multi_reduction <add>, %12, %cst [2] : vector<1x8x128xf32> to vector<1x8xf32>
      %cst_16 = arith.constant 3.906250e-03 : f32
      %14 = vector.broadcast %cst_16 : f32 to vector<1x8xf32>
      %15 = arith.mulf %13, %14 : vector<1x8xf32>
      %c0_17 = arith.constant 0 : index
      %c0_18 = arith.constant 0 : index
      %16 = vector.load %arg3[%c0_17, %c0_18] : memref<1x8xf32, #tpu.memory_space<vmem>>, vector<1x8xf32>
      tpu.vector_store %arg3[%c0_17, %c0_18], %15 {strides = array<i32>} : memref<1x8xf32, #tpu.memory_space<vmem>>, vector<1x8xf32>,
    } else {
    }
    return
  }
  func.func @transform_0(%arg0: i32, %arg1: i32) -> (i32, i32, i32) {
    %c0_i32 = arith.constant 0 : i32
    %c0_i32_0 = arith.constant 0 : i32
    return %c0_i32, %arg0, %arg1 : i32, i32, i32
  }
  func.func @transform_1(%arg0: i32, %arg1: i32) -> (i32, i32) {
    %c0_i32 = arith.constant 0 : i32
    %c0_i32_0 = arith.constant 0 : i32
    return %c0_i32, %arg0 : i32, i32
  }
}

</mosaic_0001>

<llo_original>
// kernel: tpu_custom_call.1
$region0: #{tpu_custom_call.1}
  #allocation0 [shape = 'u32[]', space=smem, size = 0x4, offset = 0x4, fixed_abs, tag = 'smem constant byte address 0x4 - core index']
  #allocation1 [shape = 'u32[72,128]{1,0:T(1,128)}', space=vmem, size = 0x9000, scoped, tag = 'internal scratch']
  #allocation2 [shape = 'f32[1,8,128]{2,1,0:T(8,128)}', space=vmem, size = 0x1000, scoped, tag = 'scratch operand']
  %s0 = inlined_call_operand.hbm [shape: f32[1,8,256], index: 0, kind: input, shape index: {}]
  %s1 = inlined_call_operand.hbm [shape: f32[1,8], index: 1, kind: output, shape index: {}]
  %s2 = sld [smem:[#allocation0]]
  $region26: #{tpu_custom_call.1} parent=0
    _
  %s4 = ssub.s32 1, %s2
  %s5 = scalar_select 0, %s4, %s2
  $region1: #{tpu_custom_call.1} parent=0
    #allocation3 [shape = 'u8[8192]{0}', space=vmem, size = 0x2000, scoped, tag = 'input window, operand 0, single buffered']
    #allocation4 [shape = 's32[1]{0}', space=sflag, size = 0x4, scoped, tag = 'scoped memory for tpu_custom_call.1']
    #allocation5 [shape = 's32[1]{0}', space=sflag, size = 0x4, scoped, tag = 'scoped memory for tpu_custom_call.1']
    #allocation6 [shape = 'u8[512]{0}', space=vmem, size = 0x400, scoped, tag = 'output window, operand 0, single buffered']
    %6 = vsyncpa [#allocation4], 0
    %7 = vsyncpa [#allocation5], 0
    // Predicated region
    $region2: #{tpu_custom_call.1} parent=1 // pred_check
      _
    $region3: #{tpu_custom_call.1} parent=1 // pred_check_branch
      %9 = sbr.rel (0) target = $region5
    $region4: #{tpu_custom_call.1} parent=1 // pred_region
      %11 = vsyncadd [#allocation4], 0
      %s13 = sshll.u32 %s0, 4
      %s14 = int_to_ptr.hbm [resolvable:$true] %s13
      %s15 = sshll.u32 [#allocation3], 4
      %s16 = int_to_ptr.vmem [resolvable:$true] %s15
      %18 = dma.hbm_to_vmem [thread:$0]  %s14, 256, %s16, [#allocation4]
    $region5: #{tpu_custom_call.1} parent=1 // pred_fallthru
      _
    // Predicated region
    $region6: #{tpu_custom_call.1} parent=1 // pred_check
      _
    $region7: #{tpu_custom_call.1} parent=1 // pred_check_branch
      %20 = sbr.rel (0) target = $region9
    $region8: #{tpu_custom_call.1} parent=1 // pred_region
      %22 = dma.done [#allocation4], 256
    $region9: #{tpu_custom_call.1} parent=1 // pred_fallthru
      _
    %p23 = scmp.eq.s32.totalorder 0, 0
    // Predicated region
    $region10: #{tpu_custom_call.1} parent=1 // pred_check
      %p24 = pneg %p23
    $region11: #{tpu_custom_call.1} parent=1 // pred_check_branch
      %26 = sbr.rel (%p24) target = $region13
    $region12: #{tpu_custom_call.1} parent=1 // pred_region
      %27 = vst [vmem:[#allocation2] sm:$0xff] 0.0
    $region13: #{tpu_custom_call.1} parent=1 // pred_fallthru
      _
    %v28 = vld [vmem:[#allocation2] sm:$0xff]
    %v29 = vld [vmem:[#allocation3] sm:$0xff]
    %v30 = vadd.f32 %v28, %v29
    %v31 = vld [vmem:[#allocation3 + $0x8] sm:$0xff]
    %v32 = vadd.f32 %v30, %v31
    %33 = vst [vmem:[#allocation2] sm:$0xff] %v32
    // Predicated region
    $region14: #{tpu_custom_call.1} parent=1 // pred_check
      %p34 = pneg %p23
    $region15: #{tpu_custom_call.1} parent=1 // pred_check_branch
      %36 = sbr.rel (%p34) target = $region17
    $region16: #{tpu_custom_call.1} parent=1 // pred_region
      %v37 = vld [vmem:[#allocation2] sm:$0xff]
      %38 = vadd.xlane.f32.xlu0 %v37
      %v39 = vpop.xlane.xlu0 %38
      %v40 = vmul.f32 %v39, 0.00390625
      %v42 = vlaneseq
      %v43 = vand.u32 %v42, 127
      %v44 = vperm.slane %v40, %v43
      %vm46 = vcmask 57344
      %47 = vst.msk [vmem:[#allocation6] sm:$0x1] %vm46, %v44
    $region17: #{tpu_custom_call.1} parent=1 // pred_fallthru
      _
    // Predicated region
    $region18: #{tpu_custom_call.1} parent=1 // pred_check
      _
    $region19: #{tpu_custom_call.1} parent=1 // pred_check_branch
      %49 = sbr.rel (0) target = $region21
    $region20: #{tpu_custom_call.1} parent=1 // pred_region
      %51 = vsyncadd [#allocation5], 0
      %s53 = sshll.u32 [#allocation6], 4
      %s54 = int_to_ptr.vmem [resolvable:$true] %s53
      %s55 = sshll.u32 %s1, 4
      %s56 = int_to_ptr.hbm [resolvable:$true] %s55
      %58 = dma.vmem_to_hbm [thread:$0]  %s54, 16, %s56, [#allocation5]
    $region21: #{tpu_custom_call.1} parent=1 // pred_fallthru
      _
    // Predicated region
    $region22: #{tpu_custom_call.1} parent=1 // pred_check
      _
    $region23: #{tpu_custom_call.1} parent=1 // pred_check_branch
      %60 = sbr.rel (0) target = $region25
    $region24: #{tpu_custom_call.1} parent=1 // pred_region
      %62 = dma.done [#allocation5], 16
    $region25: #{tpu_custom_call.1} parent=1 // pred_fallthru
      _
    %63 = vsyncpa [#allocation4], 1
    %64 = vsyncpa [#allocation5], 1

</llo_original>
